<compile_context>
chip_gen: v7x
topology: tpu7x:2x2x1
jax: 0.10.0
libtpu: 0.0.40
codegen_flags: <defaults>
</compile_context>

<pallas_src>
import functools

import jax
import jax.numpy as jnp
import numpy as np
from jax.experimental import pallas as pl
from jax.experimental.pallas import tpu as pltpu


def _ftt_kernel(z_ref, ttchain_ref, tt0t_ref, o_ref, vacc_ref, *, n_mid, rank):
    """One k-th s-tile grid step.

    z_ref:       (B, tile)       k-th s-tile of the batched inputs
    ttchain_ref: (tile, Kc)      k-th s-tile of all flattened TT cores 1..N-1
    tt0t_ref:    (rank, s)       TT[0][0]^T, VMEM-resident across the grid
    o_ref:       (B, s)          output, VMEM-resident, written in finalize
    vacc_ref:    (B, Kc) f32     scratch accumulator for Z @ ttchain over k
    """
    k = pl.program_id(0)
    nk = pl.num_programs(0)

    @pl.when(k == 0)
    def _init():
        vacc_ref[...] = jnp.zeros_like(vacc_ref)

    # Stage 1: partial contraction over this s-tile (s is the MXU K dim).
    #   v_all[b, m*r^2 + q*r + a] = sum_i Z[b,i] * TT[m+1][a,i,q] == V_{m+1}^T[q,a]
    #   v_all[b, n_mid*r^2 + a]   = sum_i Z[b,i] * TT[N-1][a,i,0] == V_{N-1}^T[0,a]
    vacc_ref[...] += jnp.dot(z_ref[...], ttchain_ref[...],
                             preferred_element_type=jnp.float32)

    # Stage 2 (once the s-reduction is complete): right-to-left chain of the
    # small V^T matrices (rank-sized only), then one lane-dense matmul.
    @pl.when(k == nk - 1)
    def _finalize():
        r2 = rank * rank
        v_all = vacc_ref[...]                                    # (B, Kc) f32
        u = v_all[:, n_mid * r2:n_mid * r2 + rank]               # (B, r) = V_{N-1}^T
        # u <- u @ V_{m+1}^T  for m = n_mid-1 .. 0.
        # NOTE: static unroll; trace time scales with N*rank (fine for small
        # configs; large ones would want a fori_loop over a (n_mid*r, r) layout).
        for m in range(n_mid - 1, -1, -1):
            base = m * r2
            acc = u[:, 0:1] * v_all[:, base:base + rank]
            for q in range(1, rank):
                acc = acc + u[:, q:q + 1] * v_all[:, base + q * rank:
                                                   base + (q + 1) * rank]
            u = acc                                              # (B, r)
        # out = u @ TT[0][0]^T  -> lane-dense (B, s) unmasked stores.
        out = jnp.dot(u.astype(tt0t_ref.dtype), tt0t_ref[...],
                      preferred_element_type=jnp.float32)
        o_ref[...] = out.astype(o_ref.dtype)


def ftt_forward(z, tt_cores, *, compute_dtype=jnp.bfloat16, tile=None):
    """Forward pass of FTT_Layer.

    z:        (s,) or (B, s) float array.
    tt_cores: list of N arrays, TT[n] of shape (ranklist[n], s, ranklist[n+1]).
    Returns float32 of shape (s,) or (B, s).
    """
    single = z.ndim == 1
    Z = z[None, :] if single else z
    B, s = Z.shape
    N = len(tt_cores)
    rank = tt_cores[0].shape[2]
    n_mid = N - 2
    assert N >= 2
    assert tt_cores[0].shape == (1, s, rank)
    assert tt_cores[-1].shape == (rank, s, 1)

    # Host-side layout plumbing (free XLA work): s on the MXU K/N dims.
    #   ttchain[i, m*r^2 + q*r + a] = TT[m+1][a, i, q]    (middle cores)
    #   ttchain[i, n_mid*r^2 + a]   = TT[N-1][a, i, 0]    (last core)
    #   tt0t[a, i]                  = TT[0][0, i, a]
    pieces = [jnp.transpose(tt_cores[m + 1], (1, 2, 0)).reshape(s, rank * rank)
              for m in range(n_mid)]
    pieces.append(jnp.transpose(tt_cores[N - 1][:, :, 0], (1, 0)))   # (s, rank)
    ttchain = jnp.concatenate(pieces, axis=1)                        # (s, Kc)
    tt0t = jnp.transpose(tt_cores[0][0], (1, 0))                     # (rank, s)
    Kc = n_mid * rank * rank + rank

    # s-tile for the contraction: largest 128-multiple divisor (less per-step
    # overhead); fall back to one block when s is not 128-aligned.
    if tile is None:
        tile = s
        for cand in (2048, 1024, 512, 256, 128):
            if s % cand == 0:
                tile = cand
                break
    assert s % tile == 0
    grid = (s // tile,)   # s-contraction tiles (reduction axis -> "arbitrary")

    kernel = functools.partial(_ftt_kernel, n_mid=n_mid, rank=rank)
    out = pl.pallas_call(
        kernel,
        out_shape=jax.ShapeDtypeStruct((B, s), jnp.float32),
        grid=grid,
        in_specs=[
            pl.BlockSpec((B, tile), lambda k: (0, k)),        # Z
            pl.BlockSpec((tile, Kc), lambda k: (k, 0)),       # ttchain
            pl.BlockSpec((rank, s), lambda k: (0, 0)),        # TT[0][0]^T (resident)
        ],
        out_specs=pl.BlockSpec((B, s), lambda k: (0, 0)),     # output (resident)
        scratch_shapes=[pltpu.VMEM((B, Kc), jnp.float32)],
        compiler_params=pltpu.CompilerParams(
            dimension_semantics=("arbitrary",),
            # Small explicit budget (buffers here are a few hundred KB); keeps
            # the same config valid on v5e (16 MiB default scoped VMEM) through
            # v7x (64 MiB physical VMEM).
            vmem_limit_bytes=32 * 1024 * 1024,
        ),
    )(Z.astype(compute_dtype), ttchain.astype(compute_dtype),
      tt0t.astype(compute_dtype))
    return out[0] if single else out


def init_tt_cores(key, N, rank, s):
    """Deterministic xavier-normal-style init matching torch.nn.init.xavier_normal_."""
    ranklist = [1] + [rank] * (N - 1) + [1]
    cores = []
    for n in range(N):
        d1, d2 = ranklist[n], ranklist[n + 1]
        key, sub = jax.random.split(key)
        fan_in = s * d2          # torch fan_in  = size(1) * receptive_field(size(2))
        fan_out = d1 * d2        # torch fan_out = size(0) * receptive_field(size(2))
        std = (2.0 / (fan_in + fan_out)) ** 0.5
        cores.append(std * jax.random.normal(sub, (d1, s, d2), jnp.float32))
    return cores


def ftt_reference(z, tt_cores):
    """Independent float64 numpy reference mirroring the PyTorch forward."""
    z = np.asarray(z, np.float64)
    cores = [np.asarray(c, np.float64) for c in tt_cores]
    f = cores[0][0]                                     # (s, rank)
    for k in range(1, len(cores)):
        V = np.einsum('i,aib->ab', z, cores[k])
        f = f @ V
    return f.reshape(-1)


if __name__ == "__main__":
    N, rank = 4, 8
    imwidth = imheight = 32          # s = 1024 -> grid (1,) with a 1024-wide tile
    s = imwidth * imheight
    B = 8

    key = jax.random.PRNGKey(0)
    key_z, key_w = jax.random.split(key)
    Z = jax.random.normal(key_z, (B, s), jnp.float32)
    tt_cores = init_tt_cores(key_w, N, rank, s)

    ref = np.stack([ftt_reference(Z[b], tt_cores) for b in range(B)])

    # f32 compute path: tight check of the kernel math / indexing.
    out32 = jax.block_until_ready(ftt_forward(Z, tt_cores, compute_dtype=jnp.float32))
    out32 = np.asarray(out32, np.float64)
    assert out32.shape == (B, s)
    assert np.allclose(out32, ref, rtol=5e-3, atol=5e-4), (
        f"f32 max abs err {np.max(np.abs(out32 - ref))}")

    # bf16-input path (the performance configuration): loose sanity tolerance.
    out16 = jax.block_until_ready(ftt_forward(Z, tt_cores))
    out16 = np.asarray(out16, np.float64)
    assert out16.shape == (B, s)
    assert np.allclose(out16, ref, rtol=1e-1, atol=1e-2), (
        f"bf16 max abs err {np.max(np.abs(out16 - ref))}")

    # Single-z path matches the original module's forward signature.
    out1 = jax.block_until_ready(ftt_forward(Z[0], tt_cores, compute_dtype=jnp.float32))
    out1 = np.asarray(out1, np.float64)
    assert out1.shape == (s,)
    assert np.allclose(out1, ref[0], rtol=5e-3, atol=5e-4)

    print("KERNEL_OK")
</pallas_src>

<mosaic_0001>
module attributes {stable_mosaic.version = 11 : i64} {
  func.func @_ftt_kernel(%arg0: i32, %arg1: memref<8x1024xf32, #tpu.memory_space<vmem>>, %arg2: memref<1024x136xf32, #tpu.memory_space<vmem>>, %arg3: memref<8x1024xf32, #tpu.memory_space<vmem>>, %arg4: memref<8x1024xf32, #tpu.memory_space<vmem>>, %arg5: memref<8x136xf32, #tpu.memory_space<vmem>>) attributes {dimension_semantics = [#tpu.dimension_semantics<arbitrary>], iteration_bounds = array<i64: 1>, scalar_prefetch = 0 : i64, scratch_operands = 1 : i64, tpu.core_type = #tpu.core_type<tc>, window_params = [{transform_indices = @transform_0, window_bounds = array<i64: 8, 1024>}, {transform_indices = @transform_1, window_bounds = array<i64: 1024, 136>}, {pipeline_mode = #tpu.pipeline_mode<synchronous>, transform_indices = @transform_2, window_bounds = array<i64: 8, 1024>}, {pipeline_mode = #tpu.pipeline_mode<synchronous>, transform_indices = @transform_3, window_bounds = array<i64: 8, 1024>}]} {
    %c0_i32 = arith.constant 0 : i32
    %0 = arith.cmpi eq, %arg0, %c0_i32 : i32
    %1 = arith.extui %0 : i1 to i32
    %c0_i32_0 = arith.constant 0 : i32
    %2 = arith.cmpi ne, %1, %c0_i32_0 : i32
    scf.if %2 {
      %cst_10 = arith.constant 0.000000e+00 : f32
      %12 = vector.broadcast %cst_10 : f32 to vector<8x136xf32>
      %c0_11 = arith.constant 0 : index
      %c0_12 = arith.constant 0 : index
      %13 = vector.load %arg5[%c0_11, %c0_12] : memref<8x136xf32, #tpu.memory_space<vmem>>, vector<8x136xf32>
      tpu.vector_store %arg5[%c0_11, %c0_12], %12 {strides = array<i32>} : memref<8x136xf32, #tpu.memory_space<vmem>>, vector<8x136xf32>,
    } else {
    }
    %c0 = arith.constant 0 : index
    %c0_1 = arith.constant 0 : index
    %3 = vector.load %arg5[%c0, %c0_1] : memref<8x136xf32, #tpu.memory_space<vmem>>, vector<8x136xf32>
    %c0_2 = arith.constant 0 : index
    %c0_3 = arith.constant 0 : index
    %4 = vector.load %arg1[%c0_2, %c0_3] : memref<8x1024xf32, #tpu.memory_space<vmem>>, vector<8x1024xf32>
    %c0_4 = arith.constant 0 : index
    %c0_5 = arith.constant 0 : index
    %5 = vector.load %arg2[%c0_4, %c0_5] : memref<1024x136xf32, #tpu.memory_space<vmem>>, vector<1024x136xf32>
    %cst = arith.constant dense<0.000000e+00> : vector<8x136xf32>
    %6 = tpu.matmul %4, %5, %cst {dimension_numbers = #tpu.dot_dimension_numbers<[1], [0], [0], [1], [0, 0, 1, 1], [], []>} : vector<8x1024xf32>, vector<1024x136xf32>, vector<8x136xf32> -> vector<8x136xf32>
    %7 = arith.addf %3, %6 : vector<8x136xf32>
    %c0_6 = arith.constant 0 : index
    %c0_7 = arith.constant 0 : index
    %8 = vector.load %arg5[%c0_6, %c0_7] : memref<8x136xf32, #tpu.memory_space<vmem>>, vector<8x136xf32>
    tpu.vector_store %arg5[%c0_6, %c0_7], %7 {strides = array<i32>} : memref<8x136xf32, #tpu.memory_space<vmem>>, vector<8x136xf32>,
    %c0_i32_8 = arith.constant 0 : i32
    %9 = arith.cmpi eq, %arg0, %c0_i32_8 : i32
    %10 = arith.extui %9 : i1 to i32
    %c0_i32_9 = arith.constant 0 : i32
    %11 = arith.cmpi ne, %10, %c0_i32_9 : i32
    scf.if %11 {
      %c0_10 = arith.constant 0 : index
      %c0_11 = arith.constant 0 : index
      %12 = vector.load %arg5[%c0_10, %c0_11] : memref<8x136xf32, #tpu.memory_space<vmem>>, vector<8x136xf32>
      %13 = vector.extract_strided_slice %12 {offsets = [0, 128], sizes = [8, 8], strides = [1, 1]} : vector<8x136xf32> to vector<8x8xf32>
      %14 = vector.extract_strided_slice %13 {offsets = [0, 0], sizes = [8, 1], strides = [1, 1]} : vector<8x8xf32> to vector<8x1xf32>
      %15 = vector.extract_strided_slice %12 {offsets = [0, 64], sizes = [8, 8], strides = [1, 1]} : vector<8x136xf32> to vector<8x8xf32>
      %16 = vector.broadcast %14 : vector<8x1xf32> to vector<8x8xf32>
      %17 = arith.mulf %16, %15 : vector<8x8xf32>
      %18 = vector.extract_strided_slice %13 {offsets = [0, 1], sizes = [8, 1], strides = [1, 1]} : vector<8x8xf32> to vector<8x1xf32>
      %19 = vector.extract_strided_slice %12 {offsets = [0, 72], sizes = [8, 8], strides = [1, 1]} : vector<8x136xf32> to vector<8x8xf32>
      %20 = vector.broadcast %18 : vector<8x1xf32> to vector<8x8xf32>
      %21 = arith.mulf %20, %19 : vector<8x8xf32>
      %22 = arith.addf %17, %21 : vector<8x8xf32>
      %23 = vector.extract_strided_slice %13 {offsets = [0, 2], sizes = [8, 1], strides = [1, 1]} : vector<8x8xf32> to vector<8x1xf32>
      %24 = vector.extract_strided_slice %12 {offsets = [0, 80], sizes = [8, 8], strides = [1, 1]} : vector<8x136xf32> to vector<8x8xf32>
      %25 = vector.broadcast %23 : vector<8x1xf32> to vector<8x8xf32>
      %26 = arith.mulf %25, %24 : vector<8x8xf32>
      %27 = arith.addf %22, %26 : vector<8x8xf32>
      %28 = vector.extract_strided_slice %13 {offsets = [0, 3], sizes = [8, 1], strides = [1, 1]} : vector<8x8xf32> to vector<8x1xf32>
      %29 = vector.extract_strided_slice %12 {offsets = [0, 88], sizes = [8, 8], strides = [1, 1]} : vector<8x136xf32> to vector<8x8xf32>
      %30 = vector.broadcast %28 : vector<8x1xf32> to vector<8x8xf32>
      %31 = arith.mulf %30, %29 : vector<8x8xf32>
      %32 = arith.addf %27, %31 : vector<8x8xf32>
      %33 = vector.extract_strided_slice %13 {offsets = [0, 4], sizes = [8, 1], strides = [1, 1]} : vector<8x8xf32> to vector<8x1xf32>
      %34 = vector.extract_strided_slice %12 {offsets = [0, 96], sizes = [8, 8], strides = [1, 1]} : vector<8x136xf32> to vector<8x8xf32>
      %35 = vector.broadcast %33 : vector<8x1xf32> to vector<8x8xf32>
      %36 = arith.mulf %35, %34 : vector<8x8xf32>
      %37 = arith.addf %32, %36 : vector<8x8xf32>
      %38 = vector.extract_strided_slice %13 {offsets = [0, 5], sizes = [8, 1], strides = [1, 1]} : vector<8x8xf32> to vector<8x1xf32>
      %39 = vector.extract_strided_slice %12 {offsets = [0, 104], sizes = [8, 8], strides = [1, 1]} : vector<8x136xf32> to vector<8x8xf32>
      %40 = vector.broadcast %38 : vector<8x1xf32> to vector<8x8xf32>
      %41 = arith.mulf %40, %39 : vector<8x8xf32>
      %42 = arith.addf %37, %41 : vector<8x8xf32>
      %43 = vector.extract_strided_slice %13 {offsets = [0, 6], sizes = [8, 1], strides = [1, 1]} : vector<8x8xf32> to vector<8x1xf32>
      %44 = vector.extract_strided_slice %12 {offsets = [0, 112], sizes = [8, 8], strides = [1, 1]} : vector<8x136xf32> to vector<8x8xf32>
      %45 = vector.broadcast %43 : vector<8x1xf32> to vector<8x8xf32>
      %46 = arith.mulf %45, %44 : vector<8x8xf32>
      %47 = arith.addf %42, %46 : vector<8x8xf32>
      %48 = vector.extract_strided_slice %13 {offsets = [0, 7], sizes = [8, 1], strides = [1, 1]} : vector<8x8xf32> to vector<8x1xf32>
      %49 = vector.extract_strided_slice %12 {offsets = [0, 120], sizes = [8, 8], strides = [1, 1]} : vector<8x136xf32> to vector<8x8xf32>
      %50 = vector.broadcast %48 : vector<8x1xf32> to vector<8x8xf32>
      %51 = arith.mulf %50, %49 : vector<8x8xf32>
      %52 = arith.addf %47, %51 : vector<8x8xf32>
      %53 = vector.extract_strided_slice %52 {offsets = [0, 0], sizes = [8, 1], strides = [1, 1]} : vector<8x8xf32> to vector<8x1xf32>
      %54 = vector.extract_strided_slice %12 {offsets = [0, 0], sizes = [8, 8], strides = [1, 1]} : vector<8x136xf32> to vector<8x8xf32>
      %55 = vector.broadcast %53 : vector<8x1xf32> to vector<8x8xf32>
      %56 = arith.mulf %55, %54 : vector<8x8xf32>
      %57 = vector.extract_strided_slice %52 {offsets = [0, 1], sizes = [8, 1], strides = [1, 1]} : vector<8x8xf32> to vector<8x1xf32>
      %58 = vector.extract_strided_slice %12 {offsets = [0, 8], sizes = [8, 8], strides = [1, 1]} : vector<8x136xf32> to vector<8x8xf32>
      %59 = vector.broadcast %57 : vector<8x1xf32> to vector<8x8xf32>
      %60 = arith.mulf %59, %58 : vector<8x8xf32>
      %61 = arith.addf %56, %60 : vector<8x8xf32>
      %62 = vector.extract_strided_slice %52 {offsets = [0, 2], sizes = [8, 1], strides = [1, 1]} : vector<8x8xf32> to vector<8x1xf32>
      %63 = vector.extract_strided_slice %12 {offsets = [0, 16], sizes = [8, 8], strides = [1, 1]} : vector<8x136xf32> to vector<8x8xf32>
      %64 = vector.broadcast %62 : vector<8x1xf32> to vector<8x8xf32>
      %65 = arith.mulf %64, %63 : vector<8x8xf32>
      %66 = arith.addf %61, %65 : vector<8x8xf32>
      %67 = vector.extract_strided_slice %52 {offsets = [0, 3], sizes = [8, 1], strides = [1, 1]} : vector<8x8xf32> to vector<8x1xf32>
      %68 = vector.extract_strided_slice %12 {offsets = [0, 24], sizes = [8, 8], strides = [1, 1]} : vector<8x136xf32> to vector<8x8xf32>
      %69 = vector.broadcast %67 : vector<8x1xf32> to vector<8x8xf32>
      %70 = arith.mulf %69, %68 : vector<8x8xf32>
      %71 = arith.addf %66, %70 : vector<8x8xf32>
      %72 = vector.extract_strided_slice %52 {offsets = [0, 4], sizes = [8, 1], strides = [1, 1]} : vector<8x8xf32> to vector<8x1xf32>
      %73 = vector.extract_strided_slice %12 {offsets = [0, 32], sizes = [8, 8], strides = [1, 1]} : vector<8x136xf32> to vector<8x8xf32>
      %74 = vector.broadcast %72 : vector<8x1xf32> to vector<8x8xf32>
      %75 = arith.mulf %74, %73 : vector<8x8xf32>
      %76 = arith.addf %71, %75 : vector<8x8xf32>
      %77 = vector.extract_strided_slice %52 {offsets = [0, 5], sizes = [8, 1], strides = [1, 1]} : vector<8x8xf32> to vector<8x1xf32>
      %78 = vector.extract_strided_slice %12 {offsets = [0, 40], sizes = [8, 8], strides = [1, 1]} : vector<8x136xf32> to vector<8x8xf32>
      %79 = vector.broadcast %77 : vector<8x1xf32> to vector<8x8xf32>
      %80 = arith.mulf %79, %78 : vector<8x8xf32>
      %81 = arith.addf %76, %80 : vector<8x8xf32>
      %82 = vector.extract_strided_slice %52 {offsets = [0, 6], sizes = [8, 1], strides = [1, 1]} : vector<8x8xf32> to vector<8x1xf32>
      %83 = vector.extract_strided_slice %12 {offsets = [0, 48], sizes = [8, 8], strides = [1, 1]} : vector<8x136xf32> to vector<8x8xf32>
      %84 = vector.broadcast %82 : vector<8x1xf32> to vector<8x8xf32>
      %85 = arith.mulf %84, %83 : vector<8x8xf32>
      %86 = arith.addf %81, %85 : vector<8x8xf32>
      %87 = vector.extract_strided_slice %52 {offsets = [0, 7], sizes = [8, 1], strides = [1, 1]} : vector<8x8xf32> to vector<8x1xf32>
      %88 = vector.extract_strided_slice %12 {offsets = [0, 56], sizes = [8, 8], strides = [1, 1]} : vector<8x136xf32> to vector<8x8xf32>
      %89 = vector.broadcast %87 : vector<8x1xf32> to vector<8x8xf32>
      %90 = arith.mulf %89, %88 : vector<8x8xf32>
      %91 = arith.addf %86, %90 : vector<8x8xf32>
      %c0_12 = arith.constant 0 : index
      %c0_13 = arith.constant 0 : index
      %92 = vector.load %arg3[%c0_12, %c0_13] : memref<8x1024xf32, #tpu.memory_space<vmem>>, vector<8x1024xf32>
      %cst_14 = arith.constant dense<0.000000e+00> : vector<8x1024xf32>
      %93 = tpu.matmul %91, %92, %cst_14 {dimension_numbers = #tpu.dot_dimension_numbers<[1], [0], [0], [1], [0, 0, 1, 1], [], []>} : vector<8x8xf32>, vector<8x1024xf32>, vector<8x1024xf32> -> vector<8x1024xf32>
      %c0_15 = arith.constant 0 : index
      %c0_16 = arith.constant 0 : index
      %94 = vector.load %arg4[%c0_15, %c0_16] : memref<8x1024xf32, #tpu.memory_space<vmem>>, vector<8x1024xf32>
      tpu.vector_store %arg4[%c0_15, %c0_16], %93 {strides = array<i32>} : memref<8x1024xf32, #tpu.memory_space<vmem>>, vector<8x1024xf32>,
    } else {
    }
    return
  }
  func.func @transform_0(%arg0: i32) -> (i32, i32) {
    %c0_i32 = arith.constant 0 : i32
    %c0_i32_0 = arith.constant 0 : i32
    return %c0_i32, %arg0 : i32, i32
  }
  func.func @transform_1(%arg0: i32) -> (i32, i32) {
    %c0_i32 = arith.constant 0 : i32
    %c0_i32_0 = arith.constant 0 : i32
    return %arg0, %c0_i32 : i32, i32
  }
  func.func @transform_2(%arg0: i32) -> (i32, i32) {
    %c0_i32 = arith.constant 0 : i32
    %c0_i32_0 = arith.constant 0 : i32
    %c0_i32_1 = arith.constant 0 : i32
    return %c0_i32, %c0_i32_0 : i32, i32
  }
  func.func @transform_3(%arg0: i32) -> (i32, i32) {
    %c0_i32 = arith.constant 0 : i32
    %c0_i32_0 = arith.constant 0 : i32
    %c0_i32_1 = arith.constant 0 : i32
    return %c0_i32, %c0_i32_0 : i32, i32
  }
}

</mosaic_0001>

<llo_original>
// kernel: tpu_custom_call.1
$region0: #{tpu_custom_call.1}
  #allocation0 [shape = 'u32[]', space=smem, size = 0x4, offset = 0x4, fixed_abs, tag = 'smem constant byte address 0x4 - core index']
  #allocation1 [shape = 'u32[144,128]{1,0:T(1,128)}', space=vmem, size = 0x12000, scoped, tag = 'internal scratch']
  #allocation2 [shape = 'f32[8,136]{1,0:T(8,128)}', space=vmem, size = 0x2000, scoped, tag = 'scratch operand']
  %s0 = inlined_call_operand.vmem [shape: f32[8,1024], index: 0, kind: input, shape index: {}]
  %s1 = inlined_call_operand.vmem [shape: f32[1024,136], index: 1, kind: input, shape index: {}]
  %s2 = inlined_call_operand.vmem [shape: f32[8,1024], index: 2, kind: input, shape index: {}]
  %s3 = inlined_call_operand.hbm [shape: f32[8,1024], index: 3, kind: output, shape index: {}]
  %s4 = sld [smem:[#allocation0]]
  $region30: #{tpu_custom_call.1} parent=0
    _
  %s6 = ssub.s32 1, %s4
  %s7 = scalar_select 0, %s6, %s4
  $region1: #{tpu_custom_call.1} parent=0
    #allocation3 [shape = 'u8[32768]{0}', space=vmem, size = 0x8000, scoped, tag = 'output window, operand 0, single buffered']
    #allocation4 [shape = 's32[1]{0}', space=sflag, size = 0x4, scoped, tag = 'scoped memory for tpu_custom_call.1']
    %8 = vsyncpa [#allocation4], 0
    // Predicated region
    $region2: #{tpu_custom_call.1} parent=1 // pred_check
      _
    $region3: #{tpu_custom_call.1} parent=1 // pred_check_branch
      %10 = sbr.rel (0) target = $region5
    $region4: #{tpu_custom_call.1} parent=1 // pred_region
      _
    $region5: #{tpu_custom_call.1} parent=1 // pred_fallthru
      _
    // Predicated region
    $region6: #{tpu_custom_call.1} parent=1 // pred_check
      _
    $region7: #{tpu_custom_call.1} parent=1 // pred_check_branch
      %12 = sbr.rel (0) target = $region9
    $region8: #{tpu_custom_call.1} parent=1 // pred_region
      _
    $region9: #{tpu_custom_call.1} parent=1 // pred_fallthru
      _
    // Predicated region
    $region10: #{tpu_custom_call.1} parent=1 // pred_check
      _
    $region11: #{tpu_custom_call.1} parent=1 // pred_check_branch
      %14 = sbr.rel (0) target = $region13
    $region12: #{tpu_custom_call.1} parent=1 // pred_region
      _
    $region13: #{tpu_custom_call.1} parent=1 // pred_fallthru
      _
    %p15 = scmp.eq.s32.totalorder 0, 0
    // Predicated region
    $region14: #{tpu_custom_call.1} parent=1 // pred_check
      %p16 = pneg %p15
    $region15: #{tpu_custom_call.1} parent=1 // pred_check_branch
      %18 = sbr.rel (%p16) target = $region17
    $region16: #{tpu_custom_call.1} parent=1 // pred_region
      %19 = vst [vmem:[#allocation2] sm:$0xff] 0.0
      %vm20 = vcmask 64512
      %21 = vst.msk [vmem:[#allocation2 + $0x8] sm:$0xff] %vm20, 0.0
    $region17: #{tpu_custom_call.1} parent=1 // pred_fallthru
      _
    %v22 = vld [vmem:[#allocation2] sm:$0xff]
    %v23 = vld [vmem:[#allocation2 + $0x8] sm:$0xff]
    %v24 = vld [vmem:[%s0] sm:$0xff]
    %v25 = vld [vmem:[%s0 + $0x8] sm:$0xff]
    %v26 = vld [vmem:[%s0 + $0x10] sm:$0xff]
    %v27 = vld [vmem:[%s0 + $0x18] sm:$0xff]
    %v28 = vld [vmem:[%s0 + $0x20] sm:$0xff]
    %v29 = vld [vmem:[%s0 + $0x28] sm:$0xff]
    %v30 = vld [vmem:[%s0 + $0x30] sm:$0xff]
    %v31 = vld [vmem:[%s0 + $0x38] sm:$0xff]
    %v32 = vld [vmem:[%s1] sm:$0xff]
    %v33 = vld [vmem:[%s1 + $0x8] sm:$0xff]
    %v34 = vld [vmem:[%s1 + $0x10] sm:$0xff]
    %v35 = vld [vmem:[%s1 + $0x18] sm:$0xff]
    %v36 = vld [vmem:[%s1 + $0x20] sm:$0xff]
    %v37 = vld [vmem:[%s1 + $0x28] sm:$0xff]
    %v38 = vld [vmem:[%s1 + $0x30] sm:$0xff]
    %v39 = vld [vmem:[%s1 + $0x38] sm:$0xff]
    %v40 = vld [vmem:[%s1 + $0x40] sm:$0xff]
    %v41 = vld [vmem:[%s1 + $0x48] sm:$0xff]
    %v42 = vld [vmem:[%s1 + $0x50] sm:$0xff]
    %v43 = vld [vmem:[%s1 + $0x58] sm:$0xff]
    %v44 = vld [vmem:[%s1 + $0x60] sm:$0xff]
    %v45 = vld [vmem:[%s1 + $0x68] sm:$0xff]
    %v46 = vld [vmem:[%s1 + $0x70] sm:$0xff]
    %v47 = vld [vmem:[%s1 + $0x78] sm:$0xff]
    %v48 = vld [vmem:[%s1 + $0x80] sm:$0xff]
    %v49 = vld [vmem:[%s1 + $0x88] sm:$0xff]
    %v50 = vld [vmem:[%s1 + $0x90] sm:$0xff]
    %v51 = vld [vmem:[%s1 + $0x98] sm:$0xff]
    %v52 = vld [vmem:[%s1 + $0xa0] sm:$0xff]
    %v53 = vld [vmem:[%s1 + $0xa8] sm:$0xff]
    %v54 = vld [vmem:[%s1 + $0xb0] sm:$0xff]
    %v55 = vld [vmem:[%s1 + $0xb8] sm:$0xff]
    %v56 = vld [vmem:[%s1 + $0xc0] sm:$0xff]
    %v57 = vld [vmem:[%s1 + $0xc8] sm:$0xff]
    %v58 = vld [vmem:[%s1 + $0xd0] sm:$0xff]
    %v59 = vld [vmem:[%s1 + $0xd8] sm:$0xff]
    %v60 = vld [vmem:[%s1 + $0xe0] sm:$0xff]
    %v61 = vld [vmem:[%s1 + $0xe8] sm:$0xff]
    %v62 = vld [vmem:[%s1 + $0xf0] sm:$0xff]
    %v63 = vld [vmem:[%s1 + $0xf8] sm:$0xff]
    %v64 = vld [vmem:[%s1 + $0x100] sm:$0xff]
    %v65 = vld [vmem:[%s1 + $0x108] sm:$0xff]
    %v66 = vld [vmem:[%s1 + $0x110] sm:$0xff]
    %v67 = vld [vmem:[%s1 + $0x118] sm:$0xff]
    %v68 = vld [vmem:[%s1 + $0x120] sm:$0xff]
    %v69 = vld [vmem:[%s1 + $0x128] sm:$0xff]
    %v70 = vld [vmem:[%s1 + $0x130] sm:$0xff]
    %v71 = vld [vmem:[%s1 + $0x138] sm:$0xff]
    %v72 = vld [vmem:[%s1 + $0x140] sm:$0xff]
    %v73 = vld [vmem:[%s1 + $0x148] sm:$0xff]
    %v74 = vld [vmem:[%s1 + $0x150] sm:$0xff]
    %v75 = vld [vmem:[%s1 + $0x158] sm:$0xff]
    %v76 = vld [vmem:[%s1 + $0x160] sm:$0xff]
    %v77 = vld [vmem:[%s1 + $0x168] sm:$0xff]
    %v78 = vld [vmem:[%s1 + $0x170] sm:$0xff]
    %v79 = vld [vmem:[%s1 + $0x178] sm:$0xff]
    %v80 = vld [vmem:[%s1 + $0x180] sm:$0xff]
    %v81 = vld [vmem:[%s1 + $0x188] sm:$0xff]
    %v82 = vld [vmem:[%s1 + $0x190] sm:$0xff]
    %v83 = vld [vmem:[%s1 + $0x198] sm:$0xff]
    %v84 = vld [vmem:[%s1 + $0x1a0] sm:$0xff]
    %v85 = vld [vmem:[%s1 + $0x1a8] sm:$0xff]
    %v86 = vld [vmem:[%s1 + $0x1b0] sm:$0xff]
    %v87 = vld [vmem:[%s1 + $0x1b8] sm:$0xff]
    %v88 = vld [vmem:[%s1 + $0x1c0] sm:$0xff]
    %v89 = vld [vmem:[%s1 + $0x1c8] sm:$0xff]
    %v90 = vld [vmem:[%s1 + $0x1d0] sm:$0xff]
    %v91 = vld [vmem:[%s1 + $0x1d8] sm:$0xff]
    %v92 = vld [vmem:[%s1 + $0x1e0] sm:$0xff]
    %v93 = vld [vmem:[%s1 + $0x1e8] sm:$0xff]
    %v94 = vld [vmem:[%s1 + $0x1f0] sm:$0xff]
    %v95 = vld [vmem:[%s1 + $0x1f8] sm:$0xff]
    %v96 = vld [vmem:[%s1 + $0x200] sm:$0xff]
    %v97 = vld [vmem:[%s1 + $0x208] sm:$0xff]
    %v98 = vld [vmem:[%s1 + $0x210] sm:$0xff]
    %v99 = vld [vmem:[%s1 + $0x218] sm:$0xff]
    %v100 = vld [vmem:[%s1 + $0x220] sm:$0xff]
    %v101 = vld [vmem:[%s1 + $0x228] sm:$0xff]
    %v102 = vld [vmem:[%s1 + $0x230] sm:$0xff]
    %v103 = vld [vmem:[%s1 + $0x238] sm:$0xff]
    %v104 = vld [vmem:[%s1 + $0x240] sm:$0xff]
    %v105 = vld [vmem:[%s1 + $0x248] sm:$0xff]
    %v106 = vld [vmem:[%s1 + $0x250] sm:$0xff]
    %v107 = vld [vmem:[%s1 + $0x258] sm:$0xff]
    %v108 = vld [vmem:[%s1 + $0x260] sm:$0xff]
    %v109 = vld [vmem:[%s1 + $0x268] sm:$0xff]
    %v110 = vld [vmem:[%s1 + $0x270] sm:$0xff]
    %v111 = vld [vmem:[%s1 + $0x278] sm:$0xff]
    %v112 = vld [vmem:[%s1 + $0x280] sm:$0xff]
    %v113 = vld [vmem:[%s1 + $0x288] sm:$0xff]
    %v114 = vld [vmem:[%s1 + $0x290] sm:$0xff]
    %v115 = vld [vmem:[%s1 + $0x298] sm:$0xff]
    %v116 = vld [vmem:[%s1 + $0x2a0] sm:$0xff]
    %v117 = vld [vmem:[%s1 + $0x2a8] sm:$0xff]
    %v118 = vld [vmem:[%s1 + $0x2b0] sm:$0xff]
    %v119 = vld [vmem:[%s1 + $0x2b8] sm:$0xff]
    %v120 = vld [vmem:[%s1 + $0x2c0] sm:$0xff]
    %v121 = vld [vmem:[%s1 + $0x2c8] sm:$0xff]
    %v122 = vld [vmem:[%s1 + $0x2d0] sm:$0xff]
    %v123 = vld [vmem:[%s1 + $0x2d8] sm:$0xff]
    %v124 = vld [vmem:[%s1 + $0x2e0] sm:$0xff]
    %v125 = vld [vmem:[%s1 + $0x2e8] sm:$0xff]
    %v126 = vld [vmem:[%s1 + $0x2f0] sm:$0xff]
    %v127 = vld [vmem:[%s1 + $0x2f8] sm:$0xff]
    %v128 = vld [vmem:[%s1 + $0x300] sm:$0xff]
    %v129 = vld [vmem:[%s1 + $0x308] sm:$0xff]
    %v130 = vld [vmem:[%s1 + $0x310] sm:$0xff]
    %v131 = vld [vmem:[%s1 + $0x318] sm:$0xff]
    %v132 = vld [vmem:[%s1 + $0x320] sm:$0xff]
    %v133 = vld [vmem:[%s1 + $0x328] sm:$0xff]
    %v134 = vld [vmem:[%s1 + $0x330] sm:$0xff]
    %v135 = vld [vmem:[%s1 + $0x338] sm:$0xff]
    %v136 = vld [vmem:[%s1 + $0x340] sm:$0xff]
    %v137 = vld [vmem:[%s1 + $0x348] sm:$0xff]
    %v138 = vld [vmem:[%s1 + $0x350] sm:$0xff]
    %v139 = vld [vmem:[%s1 + $0x358] sm:$0xff]
    %v140 = vld [vmem:[%s1 + $0x360] sm:$0xff]
    %v141 = vld [vmem:[%s1 + $0x368] sm:$0xff]
    %v142 = vld [vmem:[%s1 + $0x370] sm:$0xff]
    %v143 = vld [vmem:[%s1 + $0x378] sm:$0xff]
    %v144 = vld [vmem:[%s1 + $0x380] sm:$0xff]
    %v145 = vld [vmem:[%s1 + $0x388] sm:$0xff]
    %v146 = vld [vmem:[%s1 + $0x390] sm:$0xff]
    %v147 = vld [vmem:[%s1 + $0x398] sm:$0xff]
    %v148 = vld [vmem:[%s1 + $0x3a0] sm:$0xff]
    %v149 = vld [vmem:[%s1 + $0x3a8] sm:$0xff]
    %v150 = vld [vmem:[%s1 + $0x3b0] sm:$0xff]
    %v151 = vld [vmem:[%s1 + $0x3b8] sm:$0xff]
    %v152 = vld [vmem:[%s1 + $0x3c0] sm:$0xff]
    %v153 = vld [vmem:[%s1 + $0x3c8] sm:$0xff]
    %v154 = vld [vmem:[%s1 + $0x3d0] sm:$0xff]
    %v155 = vld [vmem:[%s1 + $0x3d8] sm:$0xff]
    %v156 = vld [vmem:[%s1 + $0x3e0] sm:$0xff]
    %v157 = vld [vmem:[%s1 + $0x3e8] sm:$0xff]
    %v158 = vld [vmem:[%s1 + $0x3f0] sm:$0xff]
    %v159 = vld [vmem:[%s1 + $0x3f8] sm:$0xff]
    %v160 = vld [vmem:[%s1 + $0x400] sm:$0xff]
    %v161 = vld [vmem:[%s1 + $0x408] sm:$0xff]
    %v162 = vld [vmem:[%s1 + $0x410] sm:$0xff]
    %v163 = vld [vmem:[%s1 + $0x418] sm:$0xff]
    %v164 = vld [vmem:[%s1 + $0x420] sm:$0xff]
    %v165 = vld [vmem:[%s1 + $0x428] sm:$0xff]
    %v166 = vld [vmem:[%s1 + $0x430] sm:$0xff]
    %v167 = vld [vmem:[%s1 + $0x438] sm:$0xff]
    %v168 = vld [vmem:[%s1 + $0x440] sm:$0xff]
    %v169 = vld [vmem:[%s1 + $0x448] sm:$0xff]
    %v170 = vld [vmem:[%s1 + $0x450] sm:$0xff]
    %v171 = vld [vmem:[%s1 + $0x458] sm:$0xff]
    %v172 = vld [vmem:[%s1 + $0x460] sm:$0xff]
    %v173 = vld [vmem:[%s1 + $0x468] sm:$0xff]
    %v174 = vld [vmem:[%s1 + $0x470] sm:$0xff]
    %v175 = vld [vmem:[%s1 + $0x478] sm:$0xff]
    %v176 = vld [vmem:[%s1 + $0x480] sm:$0xff]
    %v177 = vld [vmem:[%s1 + $0x488] sm:$0xff]
    %v178 = vld [vmem:[%s1 + $0x490] sm:$0xff]
    %v179 = vld [vmem:[%s1 + $0x498] sm:$0xff]
    %v180 = vld [vmem:[%s1 + $0x4a0] sm:$0xff]
    %v181 = vld [vmem:[%s1 + $0x4a8] sm:$0xff]
    %v182 = vld [vmem:[%s1 + $0x4b0] sm:$0xff]
    %v183 = vld [vmem:[%s1 + $0x4b8] sm:$0xff]
    %v184 = vld [vmem:[%s1 + $0x4c0] sm:$0xff]
    %v185 = vld [vmem:[%s1 + $0x4c8] sm:$0xff]
    %v186 = vld [vmem:[%s1 + $0x4d0] sm:$0xff]
    %v187 = vld [vmem:[%s1 + $0x4d8] sm:$0xff]
    %v188 = vld [vmem:[%s1 + $0x4e0] sm:$0xff]
    %v189 = vld [vmem:[%s1 + $0x4e8] sm:$0xff]
    %v190 = vld [vmem:[%s1 + $0x4f0] sm:$0xff]
    %v191 = vld [vmem:[%s1 + $0x4f8] sm:$0xff]
    %v192 = vld [vmem:[%s1 + $0x500] sm:$0xff]
    %v193 = vld [vmem:[%s1 + $0x508] sm:$0xff]
    %v194 = vld [vmem:[%s1 + $0x510] sm:$0xff]
    %v195 = vld [vmem:[%s1 + $0x518] sm:$0xff]
    %v196 = vld [vmem:[%s1 + $0x520] sm:$0xff]
    %v197 = vld [vmem:[%s1 + $0x528] sm:$0xff]
    %v198 = vld [vmem:[%s1 + $0x530] sm:$0xff]
    %v199 = vld [vmem:[%s1 + $0x538] sm:$0xff]
    %v200 = vld [vmem:[%s1 + $0x540] sm:$0xff]
    %v201 = vld [vmem:[%s1 + $0x548] sm:$0xff]
    %v202 = vld [vmem:[%s1 + $0x550] sm:$0xff]
    %v203 = vld [vmem:[%s1 + $0x558] sm:$0xff]
    %v204 = vld [vmem:[%s1 + $0x560] sm:$0xff]
    %v205 = vld [vmem:[%s1 + $0x568] sm:$0xff]
    %v206 = vld [vmem:[%s1 + $0x570] sm:$0xff]
    %v207 = vld [vmem:[%s1 + $0x578] sm:$0xff]
    %v208 = vld [vmem:[%s1 + $0x580] sm:$0xff]
    %v209 = vld [vmem:[%s1 + $0x588] sm:$0xff]
    %v210 = vld [vmem:[%s1 + $0x590] sm:$0xff]
    %v211 = vld [vmem:[%s1 + $0x598] sm:$0xff]
    %v212 = vld [vmem:[%s1 + $0x5a0] sm:$0xff]
    %v213 = vld [vmem:[%s1 + $0x5a8] sm:$0xff]
    %v214 = vld [vmem:[%s1 + $0x5b0] sm:$0xff]
    %v215 = vld [vmem:[%s1 + $0x5b8] sm:$0xff]
    %v216 = vld [vmem:[%s1 + $0x5c0] sm:$0xff]
    %v217 = vld [vmem:[%s1 + $0x5c8] sm:$0xff]
    %v218 = vld [vmem:[%s1 + $0x5d0] sm:$0xff]
    %v219 = vld [vmem:[%s1 + $0x5d8] sm:$0xff]
    %v220 = vld [vmem:[%s1 + $0x5e0] sm:$0xff]
    %v221 = vld [vmem:[%s1 + $0x5e8] sm:$0xff]
    %v222 = vld [vmem:[%s1 + $0x5f0] sm:$0xff]
    %v223 = vld [vmem:[%s1 + $0x5f8] sm:$0xff]
    %v224 = vld [vmem:[%s1 + $0x600] sm:$0xff]
    %v225 = vld [vmem:[%s1 + $0x608] sm:$0xff]
    %v226 = vld [vmem:[%s1 + $0x610] sm:$0xff]
    %v227 = vld [vmem:[%s1 + $0x618] sm:$0xff]
    %v228 = vld [vmem:[%s1 + $0x620] sm:$0xff]
    %v229 = vld [vmem:[%s1 + $0x628] sm:$0xff]
    %v230 = vld [vmem:[%s1 + $0x630] sm:$0xff]
    %v231 = vld [vmem:[%s1 + $0x638] sm:$0xff]
    %v232 = vld [vmem:[%s1 + $0x640] sm:$0xff]
    %v233 = vld [vmem:[%s1 + $0x648] sm:$0xff]
    %v234 = vld [vmem:[%s1 + $0x650] sm:$0xff]
    %v235 = vld [vmem:[%s1 + $0x658] sm:$0xff]
    %v236 = vld [vmem:[%s1 + $0x660] sm:$0xff]
    %v237 = vld [vmem:[%s1 + $0x668] sm:$0xff]
    %v238 = vld [vmem:[%s1 + $0x670] sm:$0xff]
    %v239 = vld [vmem:[%s1 + $0x678] sm:$0xff]
    %v240 = vld [vmem:[%s1 + $0x680] sm:$0xff]
    %v241 = vld [vmem:[%s1 + $0x688] sm:$0xff]
    %v242 = vld [vmem:[%s1 + $0x690] sm:$0xff]
    %v243 = vld [vmem:[%s1 + $0x698] sm:$0xff]
    %v244 = vld [vmem:[%s1 + $0x6a0] sm:$0xff]
    %v245 = vld [vmem:[%s1 + $0x6a8] sm:$0xff]
    %v246 = vld [vmem:[%s1 + $0x6b0] sm:$0xff]
    %v247 = vld [vmem:[%s1 + $0x6b8] sm:$0xff]
    %v248 = vld [vmem:[%s1 + $0x6c0] sm:$0xff]
    %v249 = vld [vmem:[%s1 + $0x6c8] sm:$0xff]
    %v250 = vld [vmem:[%s1 + $0x6d0] sm:$0xff]
    %v251 = vld [vmem:[%s1 + $0x6d8] sm:$0xff]
    %v252 = vld [vmem:[%s1 + $0x6e0] sm:$0xff]
    %v253 = vld [vmem:[%s1 + $0x6e8] sm:$0xff]
    %v254 = vld [vmem:[%s1 + $0x6f0] sm:$0xff]
    %v255 = vld [vmem:[%s1 + $0x6f8] sm:$0xff]
    %v256 = vld [vmem:[%s1 + $0x700] sm:$0xff]
    %v257 = vld [vmem:[%s1 + $0x708] sm:$0xff]
    %v258 = vld [vmem:[%s1 + $0x710] sm:$0xff]
    %v259 = vld [vmem:[%s1 + $0x718] sm:$0xff]
    %v260 = vld [vmem:[%s1 + $0x720] sm:$0xff]
    %v261 = vld [vmem:[%s1 + $0x728] sm:$0xff]
    %v262 = vld [vmem:[%s1 + $0x730] sm:$0xff]
    %v263 = vld [vmem:[%s1 + $0x738] sm:$0xff]
    %v264 = vld [vmem:[%s1 + $0x740] sm:$0xff]
    %v265 = vld [vmem:[%s1 + $0x748] sm:$0xff]
    %v266 = vld [vmem:[%s1 + $0x750] sm:$0xff]
    %v267 = vld [vmem:[%s1 + $0x758] sm:$0xff]
    %v268 = vld [vmem:[%s1 + $0x760] sm:$0xff]
    %v269 = vld [vmem:[%s1 + $0x768] sm:$0xff]
    %v270 = vld [vmem:[%s1 + $0x770] sm:$0xff]
    %v271 = vld [vmem:[%s1 + $0x778] sm:$0xff]
    %v272 = vld [vmem:[%s1 + $0x780] sm:$0xff]
    %v273 = vld [vmem:[%s1 + $0x788] sm:$0xff]
    %v274 = vld [vmem:[%s1 + $0x790] sm:$0xff]
    %v275 = vld [vmem:[%s1 + $0x798] sm:$0xff]
    %v276 = vld [vmem:[%s1 + $0x7a0] sm:$0xff]
    %v277 = vld [vmem:[%s1 + $0x7a8] sm:$0xff]
    %v278 = vld [vmem:[%s1 + $0x7b0] sm:$0xff]
    %v279 = vld [vmem:[%s1 + $0x7b8] sm:$0xff]
    %v280 = vld [vmem:[%s1 + $0x7c0] sm:$0xff]
    %v281 = vld [vmem:[%s1 + $0x7c8] sm:$0xff]
    %v282 = vld [vmem:[%s1 + $0x7d0] sm:$0xff]
    %v283 = vld [vmem:[%s1 + $0x7d8] sm:$0xff]
    %v284 = vld [vmem:[%s1 + $0x7e0] sm:$0xff]
    %v285 = vld [vmem:[%s1 + $0x7e8] sm:$0xff]
    %v286 = vld [vmem:[%s1 + $0x7f0] sm:$0xff]
    %v287 = vld [vmem:[%s1 + $0x7f8] sm:$0xff]
    %288 = vmatprep.subr.mxu0 %v33
    %289 = vmatpush1.msra.mxu0 %v32
    %290 = vmatprep.subr.mxu0 %v35
    %291 = vmatpush1.msra.mxu0 %v34
    %292 = vmatprep.subr.mxu0 %v37
    %293 = vmatpush1.msra.mxu0 %v36
    %294 = vmatprep.subr.mxu0 %v39
    %295 = vmatpush1.msra.mxu0 %v38
    %296 = vmatprep.subr.mxu0 %v41
    %297 = vmatpush1.msra.mxu0 %v40
    %298 = vmatprep.subr.mxu0 %v43
    %299 = vmatpush1.msra.mxu0 %v42
    %300 = vmatprep.subr.mxu0 %v45
    %301 = vmatpush1.msra.mxu0 %v44
    %302 = vmatprep.subr.mxu0 %v47
    %303 = vmatpush1.msra.mxu0 %v46
    %304 = vmatprep.subr.mxu0 %v49
    %305 = vmatpush1.msra.mxu0 %v48
    %306 = vmatprep.subr.mxu0 %v51
    %307 = vmatpush1.msra.mxu0 %v50
    %308 = vmatprep.subr.mxu0 %v53
    %309 = vmatpush1.msra.mxu0 %v52
    %310 = vmatprep.subr.mxu0 %v55
    %311 = vmatpush1.msra.mxu0 %v54
    %312 = vmatprep.subr.mxu0 %v57
    %313 = vmatpush1.msra.mxu0 %v56
    %314 = vmatprep.subr.mxu0 %v59
    %315 = vmatpush1.msra.mxu0 %v58
    %316 = vmatprep.subr.mxu0 %v61
    %317 = vmatpush1.msra.mxu0 %v60
    %318 = vmatprep.subr.mxu0 %v63
    %319 = vmatpush1.msra.mxu0 %v62
    %320 = vmatprep.subr.mxu0 %v65
    %321 = vmatpush1.msra.mxu0 %v64
    %322 = vmatprep.subr.mxu0 %v67
    %323 = vmatpush1.msra.mxu0 %v66
    %324 = vmatprep.subr.mxu0 %v69
    %325 = vmatpush1.msra.mxu0 %v68
    %326 = vmatprep.subr.mxu0 %v71
    %327 = vmatpush1.msra.mxu0 %v70
    %328 = vmatprep.subr.mxu0 %v73
    %329 = vmatpush1.msra.mxu0 %v72
    %330 = vmatprep.subr.mxu0 %v75
    %331 = vmatpush1.msra.mxu0 %v74
    %332 = vmatprep.subr.mxu0 %v77
    %333 = vmatpush1.msra.mxu0 %v76
    %334 = vmatprep.subr.mxu0 %v79
    %335 = vmatpush1.msra.mxu0 %v78
    %336 = vmatprep.subr.mxu0 %v81
    %337 = vmatpush1.msra.mxu0 %v80
    %338 = vmatprep.subr.mxu0 %v83
    %339 = vmatpush1.msra.mxu0 %v82
    %340 = vmatprep.subr.mxu0 %v85
    %341 = vmatpush1.msra.mxu0 %v84
    %342 = vmatprep.subr.mxu0 %v87
    %343 = vmatpush1.msra.mxu0 %v86
    %344 = vmatprep.subr.mxu0 %v89
    %345 = vmatpush1.msra.mxu0 %v88
    %346 = vmatprep.subr.mxu0 %v91
    %347 = vmatpush1.msra.mxu0 %v90
    %348 = vmatprep.subr.mxu0 %v93
    %349 = vmatpush1.msra.mxu0 %v92
    %350 = vmatprep.subr.mxu0 %v95
    %351 = vmatpush1.msra.mxu0 %v94
    %352 = vmatprep.mubr.f32.mxu0 %v25
    %353 = vmatmul.mubr.f32.gmra.mrb[0].mxu0 %v24
    %v354 = vpop.f32.mrb[0].mxu0
    %v355 = vadd.f32 0.0, %v354
    %v356 = vpop.f32.mrb[0].mxu0
    %v357 = vadd.f32 0.0, %v356
    %358 = vdwg.mxu0
    %359 = vmatprep.subr.mxu0 %v97
    %360 = vmatpush1.msra.mxu0 %v96
    %361 = vmatprep.subr.mxu0 %v99
    %362 = vmatpush1.msra.mxu0 %v98
    %363 = vmatprep.subr.mxu0 %v101
    %364 = vmatpush1.msra.mxu0 %v100
    %365 = vmatprep.subr.mxu0 %v103
    %366 = vmatpush1.msra.mxu0 %v102
    %367 = vmatprep.subr.mxu0 %v105
    %368 = vmatpush1.msra.mxu0 %v104
    %369 = vmatprep.subr.mxu0 %v107
    %370 = vmatpush1.msra.mxu0 %v106
    %371 = vmatprep.subr.mxu0 %v109
    %372 = vmatpush1.msra.mxu0 %v108
    %373 = vmatprep.subr.mxu0 %v111
    %374 = vmatpush1.msra.mxu0 %v110
    %375 = vmatprep.subr.mxu0 %v113
    %376 = vmatpush1.msra.mxu0 %v112
    %377 = vmatprep.subr.mxu0 %v115
    %378 = vmatpush1.msra.mxu0 %v114
    %379 = vmatprep.subr.mxu0 %v117
    %380 = vmatpush1.msra.mxu0 %v116
    %381 = vmatprep.subr.mxu0 %v119
    %382 = vmatpush1.msra.mxu0 %v118
    %383 = vmatprep.subr.mxu0 %v121
    %384 = vmatpush1.msra.mxu0 %v120
    %385 = vmatprep.subr.mxu0 %v123
    %386 = vmatpush1.msra.mxu0 %v122
    %387 = vmatprep.subr.mxu0 %v125
    %388 = vmatpush1.msra.mxu0 %v124
    %389 = vmatprep.subr.mxu0 %v127
    %390 = vmatpush1.msra.mxu0 %v126
    %391 = vmatprep.subr.mxu0 %v129
    %392 = vmatpush1.msra.mxu0 %v128
    %393 = vmatprep.subr.mxu0 %v131
    %394 = vmatpush1.msra.mxu0 %v130
    %395 = vmatprep.subr.mxu0 %v133
    %396 = vmatpush1.msra.mxu0 %v132
    %397 = vmatprep.subr.mxu0 %v135
    %398 = vmatpush1.msra.mxu0 %v134
    %399 = vmatprep.subr.mxu0 %v137
    %400 = vmatpush1.msra.mxu0 %v136
    %401 = vmatprep.subr.mxu0 %v139
    %402 = vmatpush1.msra.mxu0 %v138
    %403 = vmatprep.subr.mxu0 %v141
    %404 = vmatpush1.msra.mxu0 %v140
    %405 = vmatprep.subr.mxu0 %v143
    %406 = vmatpush1.msra.mxu0 %v142
    %407 = vmatprep.subr.mxu0 %v145
    %408 = vmatpush1.msra.mxu0 %v144
    %409 = vmatprep.subr.mxu0 %v147
    %410 = vmatpush1.msra.mxu0 %v146
    %411 = vmatprep.subr.mxu0 %v149
    %412 = vmatpush1.msra.mxu0 %v148
    %413 = vmatprep.subr.mxu0 %v151
    %414 = vmatpush1.msra.mxu0 %v150
    %415 = vmatprep.subr.mxu0 %v153
    %416 = vmatpush1.msra.mxu0 %v152
    %417 = vmatprep.subr.mxu0 %v155
    %418 = vmatpush1.msra.mxu0 %v154
    %419 = vmatprep.subr.mxu0 %v157
    %420 = vmatpush1.msra.mxu0 %v156
    %421 = vmatprep.subr.mxu0 %v159
    %422 = vmatpush1.msra.mxu0 %v158
    %423 = vmatprep.mubr.f32.mxu0 %v27
    %424 = vmatmul.mubr.f32.gmra.mrb[0].mxu0 %v26
    %v425 = vpop.f32.mrb[0].mxu0
    %v426 = vadd.f32 %v355, %v425
    %v427 = vpop.f32.mrb[0].mxu0
    %v428 = vadd.f32 %v357, %v427
    %429 = vdwg.mxu0
    %430 = vmatprep.subr.mxu0 %v161
    %431 = vmatpush1.msra.mxu0 %v160
    %432 = vmatprep.subr.mxu0 %v163
    %433 = vmatpush1.msra.mxu0 %v162
    %434 = vmatprep.subr.mxu0 %v165
    %435 = vmatpush1.msra.mxu0 %v164
    %436 = vmatprep.subr.mxu0 %v167
    %437 = vmatpush1.msra.mxu0 %v166
    %438 = vmatprep.subr.mxu0 %v169
    %439 = vmatpush1.msra.mxu0 %v168
    %440 = vmatprep.subr.mxu0 %v171
    %441 = vmatpush1.msra.mxu0 %v170
    %442 = vmatprep.subr.mxu0 %v173
    %443 = vmatpush1.msra.mxu0 %v172
    %444 = vmatprep.subr.mxu0 %v175
    %445 = vmatpush1.msra.mxu0 %v174
    %446 = vmatprep.subr.mxu0 %v177
    %447 = vmatpush1.msra.mxu0 %v176
    %448 = vmatprep.subr.mxu0 %v179
    %449 = vmatpush1.msra.mxu0 %v178
    %450 = vmatprep.subr.mxu0 %v181
    %451 = vmatpush1.msra.mxu0 %v180
    %452 = vmatprep.subr.mxu0 %v183
    %453 = vmatpush1.msra.mxu0 %v182
    %454 = vmatprep.subr.mxu0 %v185
    %455 = vmatpush1.msra.mxu0 %v184
    %456 = vmatprep.subr.mxu0 %v187
    %457 = vmatpush1.msra.mxu0 %v186
    %458 = vmatprep.subr.mxu0 %v189
    %459 = vmatpush1.msra.mxu0 %v188
    %460 = vmatprep.subr.mxu0 %v191
    %461 = vmatpush1.msra.mxu0 %v190
    %462 = vmatprep.subr.mxu0 %v193
    %463 = vmatpush1.msra.mxu0 %v192
    %464 = vmatprep.subr.mxu0 %v195
    %465 = vmatpush1.msra.mxu0 %v194
    %466 = vmatprep.subr.mxu0 %v197
    %467 = vmatpush1.msra.mxu0 %v196
    %468 = vmatprep.subr.mxu0 %v199
    %469 = vmatpush1.msra.mxu0 %v198
    %470 = vmatprep.subr.mxu0 %v201
    %471 = vmatpush1.msra.mxu0 %v200
    %472 = vmatprep.subr.mxu0 %v203
    %473 = vmatpush1.msra.mxu0 %v202
    %474 = vmatprep.subr.mxu0 %v205
    %475 = vmatpush1.msra.mxu0 %v204
    %476 = vmatprep.subr.mxu0 %v207
    %477 = vmatpush1.msra.mxu0 %v206
    %478 = vmatprep.subr.mxu0 %v209
    %479 = vmatpush1.msra.mxu0 %v208
    %480 = vmatprep.subr.mxu0 %v211
    %481 = vmatpush1.msra.mxu0 %v210
    %482 = vmatprep.subr.mxu0 %v213
    %483 = vmatpush1.msra.mxu0 %v212
    %484 = vmatprep.subr.mxu0 %v215
    %485 = vmatpush1.msra.mxu0 %v214
    %486 = vmatprep.subr.mxu0 %v217
    %487 = vmatpush1.msra.mxu0 %v216
    %488 = vmatprep.subr.mxu0 %v219
    %489 = vmatpush1.msra.mxu0 %v218
    %490 = vmatprep.subr.mxu0 %v221
    %491 = vmatpush1.msra.mxu0 %v220
    %492 = vmatprep.subr.mxu0 %v223
    %493 = vmatpush1.msra.mxu0 %v222
    %494 = vmatprep.mubr.f32.mxu0 %v29
    %495 = vmatmul.mubr.f32.gmra.mrb[0].mxu0 %v28
    %v496 = vpop.f32.mrb[0].mxu0
    %v497 = vadd.f32 %v426, %v496
    %v498 = vpop.f32.mrb[0].mxu0
    %v499 = vadd.f32 %v428, %v498
    %500 = vdwg.mxu0
    %501 = vmatprep.subr.mxu0 %v225
    %502 = vmatpush1.msra.mxu0 %v224
    %503 = vmatprep.subr.mxu0 %v227
    %504 = vmatpush1.msra.mxu0 %v226
    %505 = vmatprep.subr.mxu0 %v229
    %506 = vmatpush1.msra.mxu0 %v228
    %507 = vmatprep.subr.mxu0 %v231
    %508 = vmatpush1.msra.mxu0 %v230
    %509 = vmatprep.subr.mxu0 %v233
    %510 = vmatpush1.msra.mxu0 %v232
    %511 = vmatprep.subr.mxu0 %v235
    %512 = vmatpush1.msra.mxu0 %v234
    %513 = vmatprep.subr.mxu0 %v237
    %514 = vmatpush1.msra.mxu0 %v236
    %515 = vmatprep.subr.mxu0 %v239
    %516 = vmatpush1.msra.mxu0 %v238
    %517 = vmatprep.subr.mxu0 %v241
    %518 = vmatpush1.msra.mxu0 %v240
    %519 = vmatprep.subr.mxu0 %v243
    %520 = vmatpush1.msra.mxu0 %v242
    %521 = vmatprep.subr.mxu0 %v245
    %522 = vmatpush1.msra.mxu0 %v244
    %523 = vmatprep.subr.mxu0 %v247
    %524 = vmatpush1.msra.mxu0 %v246
    %525 = vmatprep.subr.mxu0 %v249
    %526 = vmatpush1.msra.mxu0 %v248
    %527 = vmatprep.subr.mxu0 %v251
    %528 = vmatpush1.msra.mxu0 %v250
    %529 = vmatprep.subr.mxu0 %v253
    %530 = vmatpush1.msra.mxu0 %v252
    %531 = vmatprep.subr.mxu0 %v255
    %532 = vmatpush1.msra.mxu0 %v254
    %533 = vmatprep.subr.mxu0 %v257
    %534 = vmatpush1.msra.mxu0 %v256
    %535 = vmatprep.subr.mxu0 %v259
    %536 = vmatpush1.msra.mxu0 %v258
    %537 = vmatprep.subr.mxu0 %v261
    %538 = vmatpush1.msra.mxu0 %v260
    %539 = vmatprep.subr.mxu0 %v263
    %540 = vmatpush1.msra.mxu0 %v262
    %541 = vmatprep.subr.mxu0 %v265
    %542 = vmatpush1.msra.mxu0 %v264
    %543 = vmatprep.subr.mxu0 %v267
    %544 = vmatpush1.msra.mxu0 %v266
    %545 = vmatprep.subr.mxu0 %v269
    %546 = vmatpush1.msra.mxu0 %v268
    %547 = vmatprep.subr.mxu0 %v271
    %548 = vmatpush1.msra.mxu0 %v270
    %549 = vmatprep.subr.mxu0 %v273
    %550 = vmatpush1.msra.mxu0 %v272
    %551 = vmatprep.subr.mxu0 %v275
    %552 = vmatpush1.msra.mxu0 %v274
    %553 = vmatprep.subr.mxu0 %v277
    %554 = vmatpush1.msra.mxu0 %v276
    %555 = vmatprep.subr.mxu0 %v279
    %556 = vmatpush1.msra.mxu0 %v278
    %557 = vmatprep.subr.mxu0 %v281
    %558 = vmatpush1.msra.mxu0 %v280
    %559 = vmatprep.subr.mxu0 %v283
    %560 = vmatpush1.msra.mxu0 %v282
    %561 = vmatprep.subr.mxu0 %v285
    %562 = vmatpush1.msra.mxu0 %v284
    %563 = vmatprep.subr.mxu0 %v287
    %564 = vmatpush1.msra.mxu0 %v286
    %565 = vmatprep.mubr.f32.mxu0 %v31
    %566 = vmatmul.mubr.f32.gmra.mrb[0].mxu0 %v30
    %v567 = vpop.f32.mrb[0].mxu0
    %v568 = vadd.f32 %v497, %v567
    %v569 = vpop.f32.mrb[0].mxu0
    %v570 = vadd.f32 %v499, %v569
    %571 = vdwg.mxu0
    %v572 = vadd.f32 %v22, %v568
    %v573 = vadd.f32 %v23, %v570
    %574 = vst [vmem:[#allocation2] sm:$0xff] %v572
    %vm575 = vcmask 64512
    %576 = vst.msk [vmem:[#allocation2 + $0x8] sm:$0xff] %vm575, %v573
    // Predicated region
    $region18: #{tpu_custom_call.1} parent=1 // pred_check
      %p577 = pneg %p15
    $region19: #{tpu_custom_call.1} parent=1 // pred_check_branch
      %579 = sbr.rel (%p577) target = $region21
    $region20: #{tpu_custom_call.1} parent=1 // pred_region
      %v580 = vld [vmem:[#allocation2] sm:$0xff]
      %v581 = vld [vmem:[#allocation2 + $0x8] sm:$0xff]
      %583 = vset.pattern.permute.xlu0 0
      %584 = vperm.xlu0 %583, %v581
      %v585 = vpop.permute.xlu0 %584
      %v587 = vmul.f32 %v585, %v580
      %588 = vset.pattern.permute.xlu0 1
      %589 = vperm.xlu0 %588, %v581
      %v590 = vpop.permute.xlu0 %589
      %v592 = vmul.f32 %v590, %v580
      %594 = vrot.lane.b32.xlu0 %v592, 120
      %v595 = vpop.permute.xlu0 %594
      %v597 = vadd.f32 %v587, %v595
      %598 = vset.pattern.permute.xlu0 2
      %599 = vperm.xlu0 %598, %v581
      %v600 = vpop.permute.xlu0 %599
      %v602 = vmul.f32 %v600, %v580
      %604 = vrot.lane.b32.xlu0 %v602, 112
      %v605 = vpop.permute.xlu0 %604
      %v607 = vadd.f32 %v597, %v605
      %608 = vset.pattern.permute.xlu0 3
      %609 = vperm.xlu0 %608, %v581
      %v610 = vpop.permute.xlu0 %609
      %v612 = vmul.f32 %v610, %v580
      %614 = vrot.lane.b32.xlu0 %v612, 104
      %v615 = vpop.permute.xlu0 %614
      %v617 = vadd.f32 %v607, %v615
      %618 = vset.pattern.permute.xlu0 4
      %619 = vperm.xlu0 %618, %v581
      %v620 = vpop.permute.xlu0 %619
      %v622 = vmul.f32 %v620, %v580
      %624 = vrot.lane.b32.xlu0 %v622, 96
      %v625 = vpop.permute.xlu0 %624
      %v627 = vadd.f32 %v617, %v625
      %628 = vset.pattern.permute.xlu0 5
      %629 = vperm.xlu0 %628, %v581
      %v630 = vpop.permute.xlu0 %629
      %v632 = vmul.f32 %v630, %v580
      %634 = vrot.lane.b32.xlu0 %v632, 88
      %v635 = vpop.permute.xlu0 %634
      %v637 = vadd.f32 %v627, %v635
      %638 = vset.pattern.permute.xlu0 6
      %639 = vperm.xlu0 %638, %v581
      %v640 = vpop.permute.xlu0 %639
      %v642 = vmul.f32 %v640, %v580
      %644 = vrot.lane.b32.xlu0 %v642, 80
      %v645 = vpop.permute.xlu0 %644
      %v647 = vadd.f32 %v637, %v645
      %648 = vset.pattern.permute.xlu0 7
      %649 = vperm.xlu0 %648, %v581
      %v650 = vpop.permute.xlu0 %649
      %v652 = vmul.f32 %v650, %v580
      %654 = vrot.lane.b32.xlu0 %v652, 72
      %v655 = vpop.permute.xlu0 %654
      %v657 = vadd.f32 %v647, %v655
      %659 = vset.pattern.permute.xlu0 64
      %660 = vperm.xlu0 %659, %v657
      %v661 = vpop.permute.xlu0 %660
      %v663 = vmul.f32 %v661, %v580
      %664 = vset.pattern.permute.xlu0 65
      %665 = vperm.xlu0 %664, %v657
      %v666 = vpop.permute.xlu0 %665
      %v668 = vmul.f32 %v666, %v580
      %670 = vrot.lane.b32.xlu0 %v668, 120
      %v671 = vpop.permute.xlu0 %670
      %v673 = vadd.f32 %v663, %v671
      %674 = vset.pattern.permute.xlu0 66
      %675 = vperm.xlu0 %674, %v657
      %v676 = vpop.permute.xlu0 %675
      %v678 = vmul.f32 %v676, %v580
      %680 = vrot.lane.b32.xlu0 %v678, 112
      %v681 = vpop.permute.xlu0 %680
      %v683 = vadd.f32 %v673, %v681
      %684 = vset.pattern.permute.xlu0 67
      %685 = vperm.xlu0 %684, %v657
      %v686 = vpop.permute.xlu0 %685
      %v688 = vmul.f32 %v686, %v580
      %690 = vrot.lane.b32.xlu0 %v688, 104
      %v691 = vpop.permute.xlu0 %690
      %v693 = vadd.f32 %v683, %v691
      %694 = vset.pattern.permute.xlu0 68
      %695 = vperm.xlu0 %694, %v657
      %v696 = vpop.permute.xlu0 %695
      %v698 = vmul.f32 %v696, %v580
      %700 = vrot.lane.b32.xlu0 %v698, 96
      %v701 = vpop.permute.xlu0 %700
      %v703 = vadd.f32 %v693, %v701
      %704 = vset.pattern.permute.xlu0 69
      %705 = vperm.xlu0 %704, %v657
      %v706 = vpop.permute.xlu0 %705
      %v708 = vmul.f32 %v706, %v580
      %710 = vrot.lane.b32.xlu0 %v708, 88
      %v711 = vpop.permute.xlu0 %710
      %v713 = vadd.f32 %v703, %v711
      %714 = vset.pattern.permute.xlu0 70
      %715 = vperm.xlu0 %714, %v657
      %v716 = vpop.permute.xlu0 %715
      %v718 = vmul.f32 %v716, %v580
      %720 = vrot.lane.b32.xlu0 %v718, 80
      %v721 = vpop.permute.xlu0 %720
      %v723 = vadd.f32 %v713, %v721
      %724 = vset.pattern.permute.xlu0 71
      %725 = vperm.xlu0 %724, %v657
      %v726 = vpop.permute.xlu0 %725
      %v728 = vmul.f32 %v726, %v580
      %730 = vrot.lane.b32.xlu0 %v728, 72
      %v731 = vpop.permute.xlu0 %730
      %v733 = vadd.f32 %v723, %v731
      %v734 = vld [vmem:[%s2] sm:$0xff]
      %v735 = vld [vmem:[%s2 + $0x8] sm:$0xff]
      %v736 = vld [vmem:[%s2 + $0x10] sm:$0xff]
      %v737 = vld [vmem:[%s2 + $0x18] sm:$0xff]
      %v738 = vld [vmem:[%s2 + $0x20] sm:$0xff]
      %v739 = vld [vmem:[%s2 + $0x28] sm:$0xff]
      %v740 = vld [vmem:[%s2 + $0x30] sm:$0xff]
      %v741 = vld [vmem:[%s2 + $0x38] sm:$0xff]
      %v743 = vsel %vm575, %v733, 0
      %745 = vmatprep.subr.mxu0 %v735
      %746 = vmatpush1.msra.mxu0 %v734
      %747 = vmatprep.subr.mxu0 0.0
      %748 = vmatpush1.msra.mxu0 0.0
      %749 = vmatprep.subr.mxu0 0.0
      %750 = vmatpush1.msra.mxu0 0.0
      %751 = vmatprep.subr.mxu0 0.0
      %752 = vmatpush1.msra.mxu0 0.0
      %753 = vmatprep.subr.mxu0 0.0
      %754 = vmatpush1.msra.mxu0 0.0
      %755 = vmatprep.subr.mxu0 0.0
      %756 = vmatpush1.msra.mxu0 0.0
      %757 = vmatprep.subr.mxu0 0.0
      %758 = vmatpush1.msra.mxu0 0.0
      %759 = vmatprep.subr.mxu0 0.0
      %760 = vmatpush1.msra.mxu0 0.0
      %761 = vmatprep.subr.mxu0 0.0
      %762 = vmatpush1.msra.mxu0 0.0
      %763 = vmatprep.subr.mxu0 0.0
      %764 = vmatpush1.msra.mxu0 0.0
      %765 = vmatprep.subr.mxu0 0.0
      %766 = vmatpush1.msra.mxu0 0.0
      %767 = vmatprep.subr.mxu0 0.0
      %768 = vmatpush1.msra.mxu0 0.0
      %769 = vmatprep.subr.mxu0 0.0
      %770 = vmatpush1.msra.mxu0 0.0
      %771 = vmatprep.subr.mxu0 0.0
      %772 = vmatpush1.msra.mxu0 0.0
      %773 = vmatprep.subr.mxu0 0.0
      %774 = vmatpush1.msra.mxu0 0.0
      %775 = vmatprep.subr.mxu0 0.0
      %776 = vmatpush1.msra.mxu0 0.0
      %777 = vmatprep.subr.mxu0 0.0
      %778 = vmatpush1.msra.mxu0 0.0
      %779 = vmatprep.subr.mxu0 0.0
      %780 = vmatpush1.msra.mxu0 0.0
      %781 = vmatprep.subr.mxu0 0.0
      %782 = vmatpush1.msra.mxu0 0.0
      %783 = vmatprep.subr.mxu0 0.0
      %784 = vmatpush1.msra.mxu0 0.0
      %785 = vmatprep.subr.mxu0 0.0
      %786 = vmatpush1.msra.mxu0 0.0
      %787 = vmatprep.subr.mxu0 0.0
      %788 = vmatpush1.msra.mxu0 0.0
      %789 = vmatprep.subr.mxu0 0.0
      %790 = vmatpush1.msra.mxu0 0.0
      %791 = vmatprep.subr.mxu0 0.0
      %792 = vmatpush1.msra.mxu0 0.0
      %793 = vmatprep.subr.mxu0 0.0
      %794 = vmatpush1.msra.mxu0 0.0
      %795 = vmatprep.subr.mxu0 0.0
      %796 = vmatpush1.msra.mxu0 0.0
      %797 = vmatprep.subr.mxu0 0.0
      %798 = vmatpush1.msra.mxu0 0.0
      %799 = vmatprep.subr.mxu0 0.0
      %800 = vmatpush1.msra.mxu0 0.0
      %801 = vmatprep.subr.mxu0 0.0
      %802 = vmatpush1.msra.mxu0 0.0
      %803 = vmatprep.subr.mxu0 0.0
      %804 = vmatpush1.msra.mxu0 0.0
      %805 = vmatprep.subr.mxu0 0.0
      %806 = vmatpush1.msra.mxu0 0.0
      %807 = vmatprep.subr.mxu0 0.0
      %808 = vmatpush1.msra.mxu0 0.0
      %809 = vmatprep.mubr.f32.mxu0 0.0
      %810 = vmatmul.mubr.f32.gmra.mrb[0].mxu0 %v743
      %v811 = vpop.f32.mrb[0].mxu0
      %v812 = vadd.f32 0.0, %v811
      %v813 = vpop.f32.mrb[0].mxu0
      %v814 = vadd.f32 0.0, %v813
      %815 = vdwg.mxu0
      %816 = vmatprep.subr.mxu0 %v737
      %817 = vmatpush1.msra.mxu0 %v736
      %818 = vmatprep.subr.mxu0 0.0
      %819 = vmatpush1.msra.mxu0 0.0
      %820 = vmatprep.subr.mxu0 0.0
      %821 = vmatpush1.msra.mxu0 0.0
      %822 = vmatprep.subr.mxu0 0.0
      %823 = vmatpush1.msra.mxu0 0.0
      %824 = vmatprep.subr.mxu0 0.0
      %825 = vmatpush1.msra.mxu0 0.0
      %826 = vmatprep.subr.mxu0 0.0
      %827 = vmatpush1.msra.mxu0 0.0
      %828 = vmatprep.subr.mxu0 0.0
      %829 = vmatpush1.msra.mxu0 0.0
      %830 = vmatprep.subr.mxu0 0.0
      %831 = vmatpush1.msra.mxu0 0.0
      %832 = vmatprep.subr.mxu0 0.0
      %833 = vmatpush1.msra.mxu0 0.0
      %834 = vmatprep.subr.mxu0 0.0
      %835 = vmatpush1.msra.mxu0 0.0
      %836 = vmatprep.subr.mxu0 0.0
      %837 = vmatpush1.msra.mxu0 0.0
      %838 = vmatprep.subr.mxu0 0.0
      %839 = vmatpush1.msra.mxu0 0.0
      %840 = vmatprep.subr.mxu0 0.0
      %841 = vmatpush1.msra.mxu0 0.0
      %842 = vmatprep.subr.mxu0 0.0
      %843 = vmatpush1.msra.mxu0 0.0
      %844 = vmatprep.subr.mxu0 0.0
      %845 = vmatpush1.msra.mxu0 0.0
      %846 = vmatprep.subr.mxu0 0.0
      %847 = vmatpush1.msra.mxu0 0.0
      %848 = vmatprep.subr.mxu0 0.0
      %849 = vmatpush1.msra.mxu0 0.0
      %850 = vmatprep.subr.mxu0 0.0
      %851 = vmatpush1.msra.mxu0 0.0
      %852 = vmatprep.subr.mxu0 0.0
      %853 = vmatpush1.msra.mxu0 0.0
      %854 = vmatprep.subr.mxu0 0.0
      %855 = vmatpush1.msra.mxu0 0.0
      %856 = vmatprep.subr.mxu0 0.0
      %857 = vmatpush1.msra.mxu0 0.0
      %858 = vmatprep.subr.mxu0 0.0
      %859 = vmatpush1.msra.mxu0 0.0
      %860 = vmatprep.subr.mxu0 0.0
      %861 = vmatpush1.msra.mxu0 0.0
      %862 = vmatprep.subr.mxu0 0.0
      %863 = vmatpush1.msra.mxu0 0.0
      %864 = vmatprep.subr.mxu0 0.0
      %865 = vmatpush1.msra.mxu0 0.0
      %866 = vmatprep.subr.mxu0 0.0
      %867 = vmatpush1.msra.mxu0 0.0
      %868 = vmatprep.subr.mxu0 0.0
      %869 = vmatpush1.msra.mxu0 0.0
      %870 = vmatprep.subr.mxu0 0.0
      %871 = vmatpush1.msra.mxu0 0.0
      %872 = vmatprep.subr.mxu0 0.0
      %873 = vmatpush1.msra.mxu0 0.0
      %874 = vmatprep.subr.mxu0 0.0
      %875 = vmatpush1.msra.mxu0 0.0
      %876 = vmatprep.subr.mxu0 0.0
      %877 = vmatpush1.msra.mxu0 0.0
      %878 = vmatprep.subr.mxu0 0.0
      %879 = vmatpush1.msra.mxu0 0.0
      %880 = vmatprep.mubr.f32.mxu0 0.0
      %881 = vmatmul.mubr.f32.gmra.mrb[0].mxu0 %v743
      %v882 = vpop.f32.mrb[0].mxu0
      %v883 = vadd.f32 0.0, %v882
      %v884 = vpop.f32.mrb[0].mxu0
      %v885 = vadd.f32 0.0, %v884
      %886 = vdwg.mxu0
      %887 = vmatprep.subr.mxu0 %v739
      %888 = vmatpush1.msra.mxu0 %v738
      %889 = vmatprep.subr.mxu0 0.0
      %890 = vmatpush1.msra.mxu0 0.0
      %891 = vmatprep.subr.mxu0 0.0
      %892 = vmatpush1.msra.mxu0 0.0
      %893 = vmatprep.subr.mxu0 0.0
      %894 = vmatpush1.msra.mxu0 0.0
      %895 = vmatprep.subr.mxu0 0.0
      %896 = vmatpush1.msra.mxu0 0.0
      %897 = vmatprep.subr.mxu0 0.0
      %898 = vmatpush1.msra.mxu0 0.0
      %899 = vmatprep.subr.mxu0 0.0
      %900 = vmatpush1.msra.mxu0 0.0
      %901 = vmatprep.subr.mxu0 0.0
      %902 = vmatpush1.msra.mxu0 0.0
      %903 = vmatprep.subr.mxu0 0.0
      %904 = vmatpush1.msra.mxu0 0.0
      %905 = vmatprep.subr.mxu0 0.0
      %906 = vmatpush1.msra.mxu0 0.0
      %907 = vmatprep.subr.mxu0 0.0
      %908 = vmatpush1.msra.mxu0 0.0
      %909 = vmatprep.subr.mxu0 0.0
      %910 = vmatpush1.msra.mxu0 0.0
      %911 = vmatprep.subr.mxu0 0.0
      %912 = vmatpush1.msra.mxu0 0.0
      %913 = vmatprep.subr.mxu0 0.0
      %914 = vmatpush1.msra.mxu0 0.0
      %915 = vmatprep.subr.mxu0 0.0
      %916 = vmatpush1.msra.mxu0 0.0
      %917 = vmatprep.subr.mxu0 0.0
      %918 = vmatpush1.msra.mxu0 0.0
      %919 = vmatprep.subr.mxu0 0.0
      %920 = vmatpush1.msra.mxu0 0.0
      %921 = vmatprep.subr.mxu0 0.0
      %922 = vmatpush1.msra.mxu0 0.0
      %923 = vmatprep.subr.mxu0 0.0
      %924 = vmatpush1.msra.mxu0 0.0
      %925 = vmatprep.subr.mxu0 0.0
      %926 = vmatpush1.msra.mxu0 0.0
      %927 = vmatprep.subr.mxu0 0.0
      %928 = vmatpush1.msra.mxu0 0.0
      %929 = vmatprep.subr.mxu0 0.0
      %930 = vmatpush1.msra.mxu0 0.0
      %931 = vmatprep.subr.mxu0 0.0
      %932 = vmatpush1.msra.mxu0 0.0
      %933 = vmatprep.subr.mxu0 0.0
      %934 = vmatpush1.msra.mxu0 0.0
      %935 = vmatprep.subr.mxu0 0.0
      %936 = vmatpush1.msra.mxu0 0.0
      %937 = vmatprep.subr.mxu0 0.0
      %938 = vmatpush1.msra.mxu0 0.0
      %939 = vmatprep.subr.mxu0 0.0
      %940 = vmatpush1.msra.mxu0 0.0
      %941 = vmatprep.subr.mxu0 0.0
      %942 = vmatpush1.msra.mxu0 0.0
      %943 = vmatprep.subr.mxu0 0.0
      %944 = vmatpush1.msra.mxu0 0.0
      %945 = vmatprep.subr.mxu0 0.0
      %946 = vmatpush1.msra.mxu0 0.0
      %947 = vmatprep.subr.mxu0 0.0
      %948 = vmatpush1.msra.mxu0 0.0
      %949 = vmatprep.subr.mxu0 0.0
      %950 = vmatpush1.msra.mxu0 0.0
      %951 = vmatprep.mubr.f32.mxu0 0.0
      %952 = vmatmul.mubr.f32.gmra.mrb[0].mxu0 %v743
      %v953 = vpop.f32.mrb[0].mxu0
      %v954 = vadd.f32 0.0, %v953
      %v955 = vpop.f32.mrb[0].mxu0
      %v956 = vadd.f32 0.0, %v955
      %957 = vdwg.mxu0
      %958 = vmatprep.subr.mxu0 %v741
      %959 = vmatpush1.msra.mxu0 %v740
      %960 = vmatprep.subr.mxu0 0.0
      %961 = vmatpush1.msra.mxu0 0.0
      %962 = vmatprep.subr.mxu0 0.0
      %963 = vmatpush1.msra.mxu0 0.0
      %964 = vmatprep.subr.mxu0 0.0
      %965 = vmatpush1.msra.mxu0 0.0
      %966 = vmatprep.subr.mxu0 0.0
      %967 = vmatpush1.msra.mxu0 0.0
      %968 = vmatprep.subr.mxu0 0.0
      %969 = vmatpush1.msra.mxu0 0.0
      %970 = vmatprep.subr.mxu0 0.0
      %971 = vmatpush1.msra.mxu0 0.0
      %972 = vmatprep.subr.mxu0 0.0
      %973 = vmatpush1.msra.mxu0 0.0
      %974 = vmatprep.subr.mxu0 0.0
      %975 = vmatpush1.msra.mxu0 0.0
      %976 = vmatprep.subr.mxu0 0.0
      %977 = vmatpush1.msra.mxu0 0.0
      %978 = vmatprep.subr.mxu0 0.0
      %979 = vmatpush1.msra.mxu0 0.0
      %980 = vmatprep.subr.mxu0 0.0
      %981 = vmatpush1.msra.mxu0 0.0
      %982 = vmatprep.subr.mxu0 0.0
      %983 = vmatpush1.msra.mxu0 0.0
      %984 = vmatprep.subr.mxu0 0.0
      %985 = vmatpush1.msra.mxu0 0.0
      %986 = vmatprep.subr.mxu0 0.0
      %987 = vmatpush1.msra.mxu0 0.0
      %988 = vmatprep.subr.mxu0 0.0
      %989 = vmatpush1.msra.mxu0 0.0
      %990 = vmatprep.subr.mxu0 0.0
      %991 = vmatpush1.msra.mxu0 0.0
      %992 = vmatprep.subr.mxu0 0.0
      %993 = vmatpush1.msra.mxu0 0.0
      %994 = vmatprep.subr.mxu0 0.0
      %995 = vmatpush1.msra.mxu0 0.0
      %996 = vmatprep.subr.mxu0 0.0
      %997 = vmatpush1.msra.mxu0 0.0
      %998 = vmatprep.subr.mxu0 0.0
      %999 = vmatpush1.msra.mxu0 0.0
      %1000 = vmatprep.subr.mxu0 0.0
      %1001 = vmatpush1.msra.mxu0 0.0
      %1002 = vmatprep.subr.mxu0 0.0
      %1003 = vmatpush1.msra.mxu0 0.0
      %1004 = vmatprep.subr.mxu0 0.0
      %1005 = vmatpush1.msra.mxu0 0.0
      %1006 = vmatprep.subr.mxu0 0.0
      %1007 = vmatpush1.msra.mxu0 0.0
      %1008 = vmatprep.subr.mxu0 0.0
      %1009 = vmatpush1.msra.mxu0 0.0
      %1010 = vmatprep.subr.mxu0 0.0
      %1011 = vmatpush1.msra.mxu0 0.0
      %1012 = vmatprep.subr.mxu0 0.0
      %1013 = vmatpush1.msra.mxu0 0.0
      %1014 = vmatprep.subr.mxu0 0.0
      %1015 = vmatpush1.msra.mxu0 0.0
      %1016 = vmatprep.subr.mxu0 0.0
      %1017 = vmatpush1.msra.mxu0 0.0
      %1018 = vmatprep.subr.mxu0 0.0
      %1019 = vmatpush1.msra.mxu0 0.0
      %1020 = vmatprep.subr.mxu0 0.0
      %1021 = vmatpush1.msra.mxu0 0.0
      %1022 = vmatprep.mubr.f32.mxu0 0.0
      %1023 = vmatmul.mubr.f32.gmra.mrb[0].mxu0 %v743
      %v1024 = vpop.f32.mrb[0].mxu0
      %v1025 = vadd.f32 0.0, %v1024
      %v1026 = vpop.f32.mrb[0].mxu0
      %v1027 = vadd.f32 0.0, %v1026
      %1028 = vdwg.mxu0
      %1029 = vst [vmem:[#allocation3] sm:$0xff] %v812
      %1030 = vst [vmem:[#allocation3 + $0x8] sm:$0xff] %v814
      %1031 = vst [vmem:[#allocation3 + $0x10] sm:$0xff] %v883
      %1032 = vst [vmem:[#allocation3 + $0x18] sm:$0xff] %v885
      %1033 = vst [vmem:[#allocation3 + $0x20] sm:$0xff] %v954
      %1034 = vst [vmem:[#allocation3 + $0x28] sm:$0xff] %v956
      %1035 = vst [vmem:[#allocation3 + $0x30] sm:$0xff] %v1025
      %1036 = vst [vmem:[#allocation3 + $0x38] sm:$0xff] %v1027
    $region21: #{tpu_custom_call.1} parent=1 // pred_fallthru
      _
    // Predicated region
    $region22: #{tpu_custom_call.1} parent=1 // pred_check
      _
    $region23: #{tpu_custom_call.1} parent=1 // pred_check_branch
      %1038 = sbr.rel (0) target = $region25
    $region24: #{tpu_custom_call.1} parent=1 // pred_region
      %s1040 = ssub.s32 1024, 1024
      %1041 = vsyncadd [#allocation4], %s1040
      %s1043 = sshll.u32 [#allocation3], 4
      %s1044 = int_to_ptr.vmem [resolvable:$true] %s1043
      %1046 = dma.vmem_to_hbm [thread:$0]  %s1044, 1024, %s3, [#allocation4]
    $region25: #{tpu_custom_call.1} parent=1 // pred_fallthru
      _
    // Predicated region
    $region26: #{tpu_custom_call.1} parent=1 // pred_check
      _
    $region27: #{tpu_custom_call.1} parent=1 // pred_check_branch
      %1048 = sbr.rel (0) target = $region29
    $region28: #{tpu_custom_call.1} parent=1 // pred_region
      %1049 = dma.done [#allocation4], 1024
    $region29: #{tpu_custom_call.1} parent=1 // pred_fallthru
      _
    %1050 = vsyncpa [#allocation4], 1

</llo_original>
